<compile_context>
chip_gen: v7x
topology: tpu7x:2x2x1
jax: 0.10.0
libtpu: 0.0.40
codegen_flags: <defaults>
</compile_context>

<pallas_src>
import math

import jax
import jax.numpy as jnp
from jax.experimental import pallas as pl
from jax.experimental.pallas import tpu as pltpu

D_MODEL = 64
MAX_LEN = 100
DROPOUT_P = 0.1  # unused in eval-mode forward


def make_positional_encoding_table(max_len: int, d_model: int) -> jnp.ndarray:
    """Deterministic pe buffer, identical to the PyTorch __init__ math.

    Returns shape (max_len, 1, d_model), float32.
    """
    position = jnp.arange(max_len, dtype=jnp.float32)[:, None]            # (L, 1)
    div_term = jnp.exp(
        jnp.arange(0, d_model, 2, dtype=jnp.float32)
        * (-math.log(10000.0) / d_model)
    )                                                                      # (D/2,)
    pe = jnp.zeros((max_len, d_model), dtype=jnp.float32)
    pe = pe.at[:, 0::2].set(jnp.sin(position * div_term))
    pe = pe.at[:, 1::2].set(jnp.cos(position * div_term))
    return pe[:, None, :]                                                  # (L, 1, D)


def _pe_add_kernel(x_ref, pe_ref, o_ref):
    # x_ref, pe_ref, o_ref: (tile_seq, B*D) lane-dense tiles.
    o_ref[...] = x_ref[...] + pe_ref[...]


def _round_up(n: int, m: int) -> int:
    return ((n + m - 1) // m) * m


def positional_encoding_forward(x: jnp.ndarray, pe: jnp.ndarray,
                                target_block_bytes: int = 2 * 1024 * 1024
                                ) -> jnp.ndarray:
    """x: (S, B, D); pe: (max_len, 1, D). Returns x + pe[:S] (eval-mode dropout)."""
    S, B, D = x.shape
    assert pe.shape[0] >= S and pe.shape[2] == D

    row = B * D                      # lane-dense trailing dim (full array dim)
    itemsize = jnp.dtype(x.dtype).itemsize
    bytes_per_row = row * itemsize

    # (S, B, D) -> (S, B*D) is a free row-major reshape.
    x2 = x.reshape(S, row)
    # pe broadcast over batch, flattened once in the wrapper (table is tiny):
    # pe_flat[s, b*D + d] = pe[s, 0, d].
    pe2 = jnp.tile(pe[:S, 0, :].astype(x.dtype), (1, B))

    # Pick number of grid steps / tile size: ~target_block_bytes per block,
    # at least 2 steps for megacore sharding once S is non-trivial.
    max_rows = max(8, target_block_bytes // bytes_per_row)
    num_steps = max(1, pl.cdiv(S, max_rows))
    if S >= 16 and num_steps < 2:
        num_steps = 2
    tile_seq = _round_up(pl.cdiv(S, num_steps), 8)
    S_pad = num_steps * tile_seq

    if S_pad != S:
        x2 = jnp.pad(x2, ((0, S_pad - S), (0, 0)))
        pe2 = jnp.pad(pe2, ((0, S_pad - S), (0, 0)))

    out2 = pl.pallas_call(
        _pe_add_kernel,
        out_shape=jax.ShapeDtypeStruct((S_pad, row), x.dtype),
        grid_spec=pltpu.PrefetchScalarGridSpec(
            num_scalar_prefetch=0,
            grid=(num_steps,),
            in_specs=[
                pl.BlockSpec((tile_seq, row), lambda i: (i, 0)),
                pl.BlockSpec((tile_seq, row), lambda i: (i, 0)),
            ],
            out_specs=pl.BlockSpec((tile_seq, row), lambda i: (i, 0)),
        ),
        compiler_params=pltpu.CompilerParams(
            dimension_semantics=("parallel",)),
    )(x2, pe2)

    return out2[:S].reshape(S, B, D)


if __name__ == "__main__":
    key = jax.random.PRNGKey(0)
    S, B, D = 8, 4, D_MODEL  # seq=8, batch=4, d_model=64
    x = jax.random.normal(key, (S, B, D), dtype=jnp.float32)

    pe = make_positional_encoding_table(MAX_LEN, D_MODEL)

    out = positional_encoding_forward(x, pe)
    out = jax.block_until_ready(out)

    # Sanity check against pure-JAX reference (eval-mode forward).
    ref = x + pe[:S]
    assert out.shape == (S, B, D)
    assert jnp.allclose(out, ref, atol=1e-6), "mismatch vs reference"

    print("KERNEL_OK")
</pallas_src>

<mosaic_0001>
module attributes {stable_mosaic.version = 11 : i64} {
  func.func @_pe_add_kernel(%arg0: i32, %arg1: memref<8x256xf32, #tpu.memory_space<vmem>>, %arg2: memref<8x256xf32, #tpu.memory_space<vmem>>, %arg3: memref<8x256xf32, #tpu.memory_space<vmem>>) attributes {dimension_semantics = [#tpu.dimension_semantics<parallel>], iteration_bounds = array<i64: 1>, scalar_prefetch = 0 : i64, scratch_operands = 0 : i64, tpu.core_type = #tpu.core_type<tc>, window_params = [{transform_indices = @transform_0, window_bounds = array<i64: 8, 256>}, {transform_indices = @transform_1, window_bounds = array<i64: 8, 256>}, {transform_indices = @transform_2, window_bounds = array<i64: 8, 256>}]} {
    %c0 = arith.constant 0 : index
    %c0_0 = arith.constant 0 : index
    %0 = vector.load %arg1[%c0, %c0_0] : memref<8x256xf32, #tpu.memory_space<vmem>>, vector<8x256xf32>
    %c0_1 = arith.constant 0 : index
    %c0_2 = arith.constant 0 : index
    %1 = vector.load %arg2[%c0_1, %c0_2] : memref<8x256xf32, #tpu.memory_space<vmem>>, vector<8x256xf32>
    %2 = arith.addf %0, %1 : vector<8x256xf32>
    %c0_3 = arith.constant 0 : index
    %c0_4 = arith.constant 0 : index
    %3 = vector.load %arg3[%c0_3, %c0_4] : memref<8x256xf32, #tpu.memory_space<vmem>>, vector<8x256xf32>
    tpu.vector_store %arg3[%c0_3, %c0_4], %2 {strides = array<i32>} : memref<8x256xf32, #tpu.memory_space<vmem>>, vector<8x256xf32>,
    return
  }
  func.func @transform_0(%arg0: i32) -> (i32, i32) {
    %c0_i32 = arith.constant 0 : i32
    %c0_i32_0 = arith.constant 0 : i32
    return %arg0, %c0_i32 : i32, i32
  }
  func.func @transform_1(%arg0: i32) -> (i32, i32) {
    %c0_i32 = arith.constant 0 : i32
    %c0_i32_0 = arith.constant 0 : i32
    return %arg0, %c0_i32 : i32, i32
  }
  func.func @transform_2(%arg0: i32) -> (i32, i32) {
    %c0_i32 = arith.constant 0 : i32
    %c0_i32_0 = arith.constant 0 : i32
    return %arg0, %c0_i32 : i32, i32
  }
}

</mosaic_0001>

<llo_original>
// kernel: tpu_custom_call.1
$region0: #{tpu_custom_call.1}
  #allocation0 [shape = 'u32[]', space=smem, size = 0x4, offset = 0x4, fixed_abs, tag = 'smem constant byte address 0x4 - core index']
  #allocation1 [shape = 'u32[144,128]{1,0:T(1,128)}', space=vmem, size = 0x12000, scoped, tag = 'internal scratch']
  %s0 = inlined_call_operand.hbm [shape: f32[8,256], index: 0, kind: input, shape index: {}]
  %s1 = inlined_call_operand.hbm [shape: f32[8,256], index: 1, kind: input, shape index: {}]
  %s2 = inlined_call_operand.hbm [shape: f32[8,256], index: 2, kind: output, shape index: {}]
  %s3 = sld [smem:[#allocation0]]
  $region26: #{tpu_custom_call.1} parent=0
    _
  %s5 = ssub.s32 1, %s3
  %s6 = scalar_select 0, %s5, %s3
  $region1: #{tpu_custom_call.1} parent=0
    #allocation2 [shape = 'u8[8192]{0}', space=vmem, size = 0x2000, scoped, tag = 'input window, operand 0, single buffered']
    #allocation3 [shape = 's32[1]{0}', space=sflag, size = 0x4, scoped, tag = 'scoped memory for tpu_custom_call.1']
    #allocation4 [shape = 's32[1]{0}', space=sflag, size = 0x4, scoped, tag = 'scoped memory for tpu_custom_call.1']
    #allocation5 [shape = 'u8[8192]{0}', space=vmem, size = 0x2000, scoped, tag = 'input window, operand 1, single buffered']
    #allocation6 [shape = 's32[1]{0}', space=sflag, size = 0x4, scoped, tag = 'scoped memory for tpu_custom_call.1']
    #allocation7 [shape = 'u8[8192]{0}', space=vmem, size = 0x2000, scoped, tag = 'output window, operand 0, single buffered']
    %7 = vsyncpa [#allocation3], 0
    %8 = vsyncpa [#allocation6], 0
    %9 = vsyncpa [#allocation4], 0
    // Predicated region
    $region2: #{tpu_custom_call.1} parent=1 // pred_check
      _
    $region3: #{tpu_custom_call.1} parent=1 // pred_check_branch
      %11 = sbr.rel (0) target = $region5
    $region4: #{tpu_custom_call.1} parent=1 // pred_region
      %s13 = ssub.s32 256, 256
      %14 = vsyncadd [#allocation3], %s13
      %s16 = sshll.u32 [#allocation2], 4
      %s17 = int_to_ptr.vmem [resolvable:$true] %s16
      %19 = dma.hbm_to_vmem [thread:$0]  %s0, 256, %s17, [#allocation3]
    $region5: #{tpu_custom_call.1} parent=1 // pred_fallthru
      _
    // Predicated region
    $region6: #{tpu_custom_call.1} parent=1 // pred_check
      _
    $region7: #{tpu_custom_call.1} parent=1 // pred_check_branch
      %21 = sbr.rel (0) target = $region9
    $region8: #{tpu_custom_call.1} parent=1 // pred_region
      %s23 = ssub.s32 256, 256
      %24 = vsyncadd [#allocation6], %s23
      %s26 = sshll.u32 [#allocation5], 4
      %s27 = int_to_ptr.vmem [resolvable:$true] %s26
      %29 = dma.hbm_to_vmem [thread:$0]  %s1, 256, %s27, [#allocation6]
    $region9: #{tpu_custom_call.1} parent=1 // pred_fallthru
      _
    // Predicated region
    $region10: #{tpu_custom_call.1} parent=1 // pred_check
      _
    $region11: #{tpu_custom_call.1} parent=1 // pred_check_branch
      %31 = sbr.rel (0) target = $region13
    $region12: #{tpu_custom_call.1} parent=1 // pred_region
      %32 = dma.done [#allocation3], 256
    $region13: #{tpu_custom_call.1} parent=1 // pred_fallthru
      _
    // Predicated region
    $region14: #{tpu_custom_call.1} parent=1 // pred_check
      _
    $region15: #{tpu_custom_call.1} parent=1 // pred_check_branch
      %34 = sbr.rel (0) target = $region17
    $region16: #{tpu_custom_call.1} parent=1 // pred_region
      %35 = dma.done [#allocation6], 256
    $region17: #{tpu_custom_call.1} parent=1 // pred_fallthru
      _
    %v36 = vld [vmem:[#allocation2] sm:$0xff]
    %v37 = vld [vmem:[#allocation2 + $0x8] sm:$0xff]
    %v38 = vld [vmem:[#allocation5] sm:$0xff]
    %v39 = vld [vmem:[#allocation5 + $0x8] sm:$0xff]
    %v40 = vadd.f32 %v36, %v38
    %v41 = vadd.f32 %v37, %v39
    %42 = vst [vmem:[#allocation7] sm:$0xff] %v40
    %43 = vst [vmem:[#allocation7 + $0x8] sm:$0xff] %v41
    // Predicated region
    $region18: #{tpu_custom_call.1} parent=1 // pred_check
      _
    $region19: #{tpu_custom_call.1} parent=1 // pred_check_branch
      %45 = sbr.rel (0) target = $region21
    $region20: #{tpu_custom_call.1} parent=1 // pred_region
      %s47 = ssub.s32 256, 256
      %48 = vsyncadd [#allocation4], %s47
      %s50 = sshll.u32 [#allocation7], 4
      %s51 = int_to_ptr.vmem [resolvable:$true] %s50
      %53 = dma.vmem_to_hbm [thread:$0]  %s51, 256, %s2, [#allocation4]
    $region21: #{tpu_custom_call.1} parent=1 // pred_fallthru
      _
    // Predicated region
    $region22: #{tpu_custom_call.1} parent=1 // pred_check
      _
    $region23: #{tpu_custom_call.1} parent=1 // pred_check_branch
      %55 = sbr.rel (0) target = $region25
    $region24: #{tpu_custom_call.1} parent=1 // pred_region
      %56 = dma.done [#allocation4], 256
    $region25: #{tpu_custom_call.1} parent=1 // pred_fallthru
      _
    %57 = vsyncpa [#allocation3], 1
    %58 = vsyncpa [#allocation6], 1
    %59 = vsyncpa [#allocation4], 1

</llo_original>
